<compile_context>
chip_gen: v5e
topology: v5e:2x2
jax: 0.10.0
libtpu: 0.0.40
codegen_flags: <defaults>
</compile_context>

<pallas_src>
import functools
import numpy as np
import jax
import jax.numpy as jnp
from jax import lax
from jax.experimental import pallas as pl
from jax.experimental.pallas import tpu as pltpu

HIDDEN = 64
HEAD_W = 128   # lane-dense packed head / output width


def _round_up(x, m):
    return (x + m - 1) // m * m


def _cdiv(a, b):
    return -(-a // b)


def _choose_tiles(B, block_b):
    """Pick (TB, n_tiles) with minimal padding; >=2 tiles for large B (v7x megacore)."""
    n_tiles = _cdiv(B, block_b)
    if n_tiles == 1 and B > 512:
        n_tiles = 2
    TB = _round_up(_cdiv(B, n_tiles), 8)
    n_tiles = _cdiv(B, TB)          # re-derive: avoid an all-padding trailing tile
    return TB, n_tiles


def ppo_kernel(x_ref, w1_ref, b1_ref, w2_ref, b2_ref, wh_ref, bh_ref,
               slab_ref, val_ref, *, action_dim):
    A = action_dim

    # In-kernel f32 -> bf16 cast of the batch tile (no wrapper-side copy pass).
    x = x_ref[...].astype(jnp.bfloat16)

    # linear1 + ReLU (bf16 matmul, f32 accumulate)
    h = jnp.dot(x, w1_ref[...], preferred_element_type=jnp.float32)
    h = jnp.maximum(h + b1_ref[...], 0.0).astype(jnp.bfloat16)

    # linear2 + ReLU
    h = jnp.dot(h, w2_ref[...], preferred_element_type=jnp.float32)
    h = jnp.maximum(h + b2_ref[...], 0.0).astype(jnp.bfloat16)

    # TODO(synk): `self.drop = F.dropout(0.2)` in the module is a tensor, not a layer;
    # dropout is treated as identity here (inference-mode semantics).

    # Fused heads: columns [0,A)=logits, [A,2A)=logits (duplicate), 2A=value, rest=0.
    heads = jnp.dot(h, wh_ref[...], preferred_element_type=jnp.float32) + bh_ref[...]

    # (1, 128) lane-index masks; broadcast against (TB, 128) — no per-tile full iota.
    col = lax.broadcasted_iota(jnp.int32, (1, HEAD_W), 1)
    is_logit = col < A
    in_logp = jnp.logical_and(col >= A, col < 2 * A)

    # Masked log-sum-exp over the logit columns only.
    masked = jnp.where(is_logit, heads, jnp.float32(-1e30))
    m = jnp.max(masked, axis=-1, keepdims=True)
    lse = m + jnp.log(jnp.sum(jnp.exp(masked - m), axis=-1, keepdims=True))

    # Lane-dense bf16 slab: [0,A) logits, [A,2A) log-probs, rest as computed.
    slab_ref[...] = jnp.where(in_logp, heads - lse, heads).astype(jnp.bfloat16)

    # Value: extract lane 2A (f32, 4 B/row of HBM traffic) via a lane reduce.
    val_ref[...] = jnp.sum(jnp.where(col == 2 * A, heads, 0.0),
                           axis=-1, keepdims=True)


def _pack_head_params(params, action_dim):
    """Pack pi_logits and value heads into one (64, 128) weight / (1, 128) bias."""
    A = action_dim
    wh = jnp.zeros((HIDDEN, HEAD_W), jnp.float32)
    wh = wh.at[:, 0:A].set(params["wp"]).at[:, A:2 * A].set(params["wp"])
    wh = wh.at[:, 2 * A:2 * A + 1].set(params["wv"])
    bh = jnp.zeros((1, HEAD_W), jnp.float32)
    bh = bh.at[:, 0:A].set(params["bp"]).at[:, A:2 * A].set(params["bp"])
    bh = bh.at[:, 2 * A:2 * A + 1].set(params["bv"])
    return wh, bh


def ppo_forward(x, params, *, block_b=2048):
    B, S = x.shape
    A = params["wp"].shape[1]
    assert 2 * A + 1 <= HEAD_W, "action_dim too large for packed 128-wide slab"

    wh, bh = _pack_head_params(params, A)

    TB, n_tiles = _choose_tiles(B, block_b)
    B_pad = TB * n_tiles

    xp = x
    if B_pad != B:
        xp = jnp.pad(x, ((0, B_pad - B), (0, 0)))   # minimal (< n_tiles*8 rows)

    w1 = params["w1"].astype(jnp.bfloat16)
    w2 = params["w2"].astype(jnp.bfloat16)
    whb = wh.astype(jnp.bfloat16)

    flops = 2 * B_pad * (S * HIDDEN + HIDDEN * HIDDEN + HIDDEN * HEAD_W)
    bytes_accessed = (B_pad * S * 4                      # x (f32, cast in-kernel)
                      + w1.size * 2 + w2.size * 2 + whb.size * 2
                      + (params["b1"].size + params["b2"].size) * 4 + bh.size * 4
                      + B_pad * HEAD_W * 2               # bf16 slab out
                      + B_pad * 4)                       # f32 value out
    cost = pl.CostEstimate(flops=flops,
                           transcendentals=B_pad * HEAD_W,
                           bytes_accessed=bytes_accessed)

    slab, val = pl.pallas_call(
        functools.partial(ppo_kernel, action_dim=A),
        out_shape=(jax.ShapeDtypeStruct((B_pad, HEAD_W), jnp.bfloat16),
                   jax.ShapeDtypeStruct((B_pad, 1), jnp.float32)),
        grid=(n_tiles,),
        in_specs=[
            pl.BlockSpec((TB, S), lambda i: (i, 0)),            # x tile (pipelined)
            pl.BlockSpec((S, HIDDEN), lambda i: (0, 0)),        # w1 (VMEM-resident)
            pl.BlockSpec((1, HIDDEN), lambda i: (0, 0)),        # b1
            pl.BlockSpec((HIDDEN, HIDDEN), lambda i: (0, 0)),   # w2
            pl.BlockSpec((1, HIDDEN), lambda i: (0, 0)),        # b2
            pl.BlockSpec((HIDDEN, HEAD_W), lambda i: (0, 0)),   # packed head weights
            pl.BlockSpec((1, HEAD_W), lambda i: (0, 0)),        # packed head bias
        ],
        out_specs=(
            pl.BlockSpec((TB, HEAD_W), lambda i: (i, 0)),       # bf16 lane-dense slab
            pl.BlockSpec((TB, 1), lambda i: (i, 0)),            # f32 value column
        ),
        compiler_params=pltpu.CompilerParams(
            dimension_semantics=("parallel",),
            vmem_limit_bytes=48 * 1024 * 1024),
        cost_estimate=cost,
    )(xp, w1, params["b1"], w2, params["b2"], whb, bh)

    logits = slab[:B, 0:A]
    log_probs = slab[:B, A:2 * A]
    value = val[:B, 0]                    # matches `self.value(h).reshape(-1)`
    return (logits, log_probs), value


def init_params(key, state_dim, action_dim):
    """Deterministic init mirroring the PyTorch module: orthogonal weights with gains
    sqrt(2), sqrt(2), sqrt(0.01), default for value; weights stored as (in, out)."""
    k1, k2, k3, k4, kb1, kb2, kb3, kb4 = jax.random.split(key, 8)
    ortho = jax.nn.initializers.orthogonal

    def lin(kw, kb, fan_in, fan_out, gain):
        w = ortho(scale=gain)(kw, (fan_out, fan_in), jnp.float32).T
        bound = 1.0 / np.sqrt(fan_in)
        b = jax.random.uniform(kb, (1, fan_out), jnp.float32, -bound, bound)
        return w, b

    w1, b1 = lin(k1, kb1, state_dim, HIDDEN, np.sqrt(2.0))
    w2, b2 = lin(k2, kb2, HIDDEN, HIDDEN, np.sqrt(2.0))
    wp, bp = lin(k3, kb3, HIDDEN, action_dim, np.sqrt(0.01))
    wv, bv = lin(k4, kb4, HIDDEN, 1, 1.0)
    return dict(w1=w1, b1=b1, w2=w2, b2=b2, wp=wp, bp=bp, wv=wv, bv=bv)


def ppo_reference(x, params):
    """Pure-JAX reference with matching precision (bf16 matmuls, f32 accumulate)."""
    xb = x.astype(jnp.bfloat16)
    w1 = params["w1"].astype(jnp.bfloat16)
    w2 = params["w2"].astype(jnp.bfloat16)
    wp = params["wp"].astype(jnp.bfloat16)
    wv = params["wv"].astype(jnp.bfloat16)
    h = jnp.maximum(jnp.dot(xb, w1, preferred_element_type=jnp.float32)
                    + params["b1"], 0.0).astype(jnp.bfloat16)
    h = jnp.maximum(jnp.dot(h, w2, preferred_element_type=jnp.float32)
                    + params["b2"], 0.0).astype(jnp.bfloat16)
    logits = jnp.dot(h, wp, preferred_element_type=jnp.float32) + params["bp"]
    value = (jnp.dot(h, wv, preferred_element_type=jnp.float32)
             + params["bv"]).reshape(-1)
    log_probs = jax.nn.log_softmax(logits, axis=-1)
    return logits, log_probs, value


def _check(x, params, block_b):
    (logits, log_probs), value = ppo_forward(x, params, block_b=block_b)
    jax.block_until_ready((logits, log_probs, value))
    ref_logits, ref_logp, ref_value = ppo_reference(x, params)
    # logits / log-probs are stored as bf16 (memory-bound output slab) -> 2e-2 tol.
    lg = np.asarray(logits.astype(jnp.float32))
    lp = np.asarray(log_probs.astype(jnp.float32))
    v = np.asarray(value)
    assert np.allclose(lg, np.asarray(ref_logits), atol=2e-2), "logits mismatch"
    assert np.allclose(lp, np.asarray(ref_logp), atol=2e-2), "log_probs mismatch"
    assert np.allclose(v, np.asarray(ref_value), atol=2e-3), "value mismatch"


if __name__ == "__main__":
    state_dim, action_dim = 32, 4
    key = jax.random.PRNGKey(0)
    kx, kp = jax.random.split(key)
    params = init_params(kp, state_dim, action_dim)

    # Small canonical case (single tile).
    x = jax.random.normal(kx, (8, state_dim), jnp.float32)
    _check(x, params, block_b=2048)

    # Multi-tile case (exercises grid > 1 with minimal-waste tiling).
    x2 = jax.random.normal(jax.random.PRNGKey(1), (600, state_dim), jnp.float32)
    _check(x2, params, block_b=256)

    # Padding case (B not a multiple of the chosen tile).
    x3 = jax.random.normal(jax.random.PRNGKey(2), (45, state_dim), jnp.float32)
    _check(x3, params, block_b=16)

    print("KERNEL_OK")
</pallas_src>

<mosaic_0001>
module attributes {stable_mosaic.version = 11 : i64} {
  func.func @ppo_kernel(%arg0: i32, %arg1: memref<8x32xf32, #tpu.memory_space<vmem>>, %arg2: memref<32x64xbf16, #tpu.memory_space<vmem>>, %arg3: memref<1x64xf32, #tpu.memory_space<vmem>>, %arg4: memref<64x64xbf16, #tpu.memory_space<vmem>>, %arg5: memref<1x64xf32, #tpu.memory_space<vmem>>, %arg6: memref<64x128xbf16, #tpu.memory_space<vmem>>, %arg7: memref<1x128xf32, #tpu.memory_space<vmem>>, %arg8: memref<8x128xbf16, #tpu.memory_space<vmem>>, %arg9: memref<8x1xf32, #tpu.memory_space<vmem>>) attributes {dimension_semantics = [#tpu.dimension_semantics<parallel>], iteration_bounds = array<i64: 1>, scalar_prefetch = 0 : i64, scratch_operands = 0 : i64, tpu.core_type = #tpu.core_type<tc>, window_params = [{transform_indices = @transform_0, window_bounds = array<i64: 8, 32>}, {pipeline_mode = #tpu.pipeline_mode<synchronous>, transform_indices = @transform_1, window_bounds = array<i64: 32, 64>}, {pipeline_mode = #tpu.pipeline_mode<synchronous>, transform_indices = @transform_2, window_bounds = array<i64: 1, 64>}, {pipeline_mode = #tpu.pipeline_mode<synchronous>, transform_indices = @transform_3, window_bounds = array<i64: 64, 64>}, {pipeline_mode = #tpu.pipeline_mode<synchronous>, transform_indices = @transform_4, window_bounds = array<i64: 1, 64>}, {pipeline_mode = #tpu.pipeline_mode<synchronous>, transform_indices = @transform_5, window_bounds = array<i64: 64, 128>}, {pipeline_mode = #tpu.pipeline_mode<synchronous>, transform_indices = @transform_6, window_bounds = array<i64: 1, 128>}, {transform_indices = @transform_7, window_bounds = array<i64: 8, 128>}, {transform_indices = @transform_8, window_bounds = array<i64: 8, 1>}]} {
    %c0 = arith.constant 0 : index
    %c0_0 = arith.constant 0 : index
    %0 = vector.load %arg1[%c0, %c0_0] : memref<8x32xf32, #tpu.memory_space<vmem>>, vector<8x32xf32>
    %1 = arith.truncf %0 : vector<8x32xf32> to vector<8x32xbf16>
    %c0_1 = arith.constant 0 : index
    %c0_2 = arith.constant 0 : index
    %2 = vector.load %arg2[%c0_1, %c0_2] : memref<32x64xbf16, #tpu.memory_space<vmem>>, vector<32x64xbf16>
    %cst = arith.constant dense<0.000000e+00> : vector<8x64xf32>
    %3 = tpu.matmul %1, %2, %cst {dimension_numbers = #tpu.dot_dimension_numbers<[1], [0], [0], [1], [0, 0, 1, 1], [], []>} : vector<8x32xbf16>, vector<32x64xbf16>, vector<8x64xf32> -> vector<8x64xf32>
    %c0_3 = arith.constant 0 : index
    %c0_4 = arith.constant 0 : index
    %4 = vector.load %arg3[%c0_3, %c0_4] : memref<1x64xf32, #tpu.memory_space<vmem>>, vector<1x64xf32>
    %5 = vector.broadcast %4 : vector<1x64xf32> to vector<8x64xf32>
    %6 = arith.addf %3, %5 : vector<8x64xf32>
    %cst_5 = arith.constant 0.000000e+00 : f32
    %7 = vector.broadcast %cst_5 : f32 to vector<8x64xf32>
    %8 = arith.maximumf %6, %7 : vector<8x64xf32>
    %9 = arith.truncf %8 : vector<8x64xf32> to vector<8x64xbf16>
    %c0_6 = arith.constant 0 : index
    %c0_7 = arith.constant 0 : index
    %10 = vector.load %arg4[%c0_6, %c0_7] : memref<64x64xbf16, #tpu.memory_space<vmem>>, vector<64x64xbf16>
    %cst_8 = arith.constant dense<0.000000e+00> : vector<8x64xf32>
    %11 = tpu.matmul %9, %10, %cst_8 {dimension_numbers = #tpu.dot_dimension_numbers<[1], [0], [0], [1], [0, 0, 1, 1], [], []>} : vector<8x64xbf16>, vector<64x64xbf16>, vector<8x64xf32> -> vector<8x64xf32>
    %c0_9 = arith.constant 0 : index
    %c0_10 = arith.constant 0 : index
    %12 = vector.load %arg5[%c0_9, %c0_10] : memref<1x64xf32, #tpu.memory_space<vmem>>, vector<1x64xf32>
    %13 = vector.broadcast %12 : vector<1x64xf32> to vector<8x64xf32>
    %14 = arith.addf %11, %13 : vector<8x64xf32>
    %cst_11 = arith.constant 0.000000e+00 : f32
    %15 = vector.broadcast %cst_11 : f32 to vector<8x64xf32>
    %16 = arith.maximumf %14, %15 : vector<8x64xf32>
    %17 = arith.truncf %16 : vector<8x64xf32> to vector<8x64xbf16>
    %c0_12 = arith.constant 0 : index
    %c0_13 = arith.constant 0 : index
    %18 = vector.load %arg6[%c0_12, %c0_13] : memref<64x128xbf16, #tpu.memory_space<vmem>>, vector<64x128xbf16>
    %cst_14 = arith.constant dense<0.000000e+00> : vector<8x128xf32>
    %19 = tpu.matmul %17, %18, %cst_14 {dimension_numbers = #tpu.dot_dimension_numbers<[1], [0], [0], [1], [0, 0, 1, 1], [], []>} : vector<8x64xbf16>, vector<64x128xbf16>, vector<8x128xf32> -> vector<8x128xf32>
    %c0_15 = arith.constant 0 : index
    %c0_16 = arith.constant 0 : index
    %20 = vector.load %arg7[%c0_15, %c0_16] : memref<1x128xf32, #tpu.memory_space<vmem>>, vector<1x128xf32>
    %21 = vector.broadcast %20 : vector<1x128xf32> to vector<8x128xf32>
    %22 = arith.addf %19, %21 : vector<8x128xf32>
    %23 = tpu.iota {dimensions = array<i32: 1>} : vector<1x128xi32>
    %c4_i32 = arith.constant 4 : i32
    %24 = vector.broadcast %c4_i32 : i32 to vector<1x128xi32>
    %25 = arith.cmpi slt, %23, %24 : vector<1x128xi32>
    %c4_i32_17 = arith.constant 4 : i32
    %26 = vector.broadcast %c4_i32_17 : i32 to vector<1x128xi32>
    %27 = arith.cmpi sge, %23, %26 : vector<1x128xi32>
    %c8_i32 = arith.constant 8 : i32
    %28 = vector.broadcast %c8_i32 : i32 to vector<1x128xi32>
    %29 = arith.cmpi slt, %23, %28 : vector<1x128xi32>
    %30 = arith.andi %27, %29 : vector<1x128xi1>
    %cst_18 = arith.constant -1.000000e+30 : f32
    %31 = vector.shape_cast %25 : vector<1x128xi1> to vector<1x128xi1>
    %32 = vector.broadcast %31 : vector<1x128xi1> to vector<8x128xi1>
    %33 = vector.broadcast %cst_18 : f32 to vector<8x128xf32>
    %34 = arith.select %32, %22, %33 : vector<8x128xi1>, vector<8x128xf32>
    %cst_19 = arith.constant dense<0xFF800000> : vector<8xf32>
    %35 = vector.multi_reduction <maximumf>, %34, %cst_19 [1] : vector<8x128xf32> to vector<8xf32>
    %36 = vector.shape_cast %35 : vector<8xf32> to vector<8x1xf32>
    %37 = vector.broadcast %36 : vector<8x1xf32> to vector<8x128xf32>
    %38 = arith.subf %34, %37 : vector<8x128xf32>
    %39 = math.exp %38 : vector<8x128xf32>
    %cst_20 = arith.constant dense<0.000000e+00> : vector<8xf32>
    %40 = vector.multi_reduction <add>, %39, %cst_20 [1] : vector<8x128xf32> to vector<8xf32>
    %41 = vector.shape_cast %40 : vector<8xf32> to vector<8x1xf32>
    %42 = math.log %41 : vector<8x1xf32>
    %43 = arith.addf %36, %42 : vector<8x1xf32>
    %44 = vector.broadcast %43 : vector<8x1xf32> to vector<8x128xf32>
    %45 = arith.subf %22, %44 : vector<8x128xf32>
    %46 = vector.shape_cast %30 : vector<1x128xi1> to vector<1x128xi1>
    %47 = vector.broadcast %46 : vector<1x128xi1> to vector<8x128xi1>
    %48 = arith.select %47, %45, %22 : vector<8x128xi1>, vector<8x128xf32>
    %49 = arith.truncf %48 : vector<8x128xf32> to vector<8x128xbf16>
    %c0_21 = arith.constant 0 : index
    %c0_22 = arith.constant 0 : index
    %50 = vector.load %arg8[%c0_21, %c0_22] : memref<8x128xbf16, #tpu.memory_space<vmem>>, vector<8x128xbf16>
    tpu.vector_store %arg8[%c0_21, %c0_22], %49 {strides = array<i32>} : memref<8x128xbf16, #tpu.memory_space<vmem>>, vector<8x128xbf16>,
    %c8_i32_23 = arith.constant 8 : i32
    %51 = vector.broadcast %c8_i32_23 : i32 to vector<1x128xi32>
    %52 = arith.cmpi eq, %23, %51 : vector<1x128xi32>
    %cst_24 = arith.constant 0.000000e+00 : f32
    %53 = vector.shape_cast %52 : vector<1x128xi1> to vector<1x128xi1>
    %54 = vector.broadcast %53 : vector<1x128xi1> to vector<8x128xi1>
    %55 = vector.broadcast %cst_24 : f32 to vector<8x128xf32>
    %56 = arith.select %54, %22, %55 : vector<8x128xi1>, vector<8x128xf32>
    %cst_25 = arith.constant dense<0.000000e+00> : vector<8xf32>
    %57 = vector.multi_reduction <add>, %56, %cst_25 [1] : vector<8x128xf32> to vector<8xf32>
    %58 = vector.shape_cast %57 : vector<8xf32> to vector<8x1xf32>
    %c0_26 = arith.constant 0 : index
    %c0_27 = arith.constant 0 : index
    %59 = vector.load %arg9[%c0_26, %c0_27] : memref<8x1xf32, #tpu.memory_space<vmem>>, vector<8x1xf32>
    tpu.vector_store %arg9[%c0_26, %c0_27], %58 {strides = array<i32>} : memref<8x1xf32, #tpu.memory_space<vmem>>, vector<8x1xf32>,
    return
  }
  func.func @transform_0(%arg0: i32) -> (i32, i32) {
    %c0_i32 = arith.constant 0 : i32
    %c0_i32_0 = arith.constant 0 : i32
    return %arg0, %c0_i32 : i32, i32
  }
  func.func @transform_1(%arg0: i32) -> (i32, i32) {
    %c0_i32 = arith.constant 0 : i32
    %c0_i32_0 = arith.constant 0 : i32
    %c0_i32_1 = arith.constant 0 : i32
    return %c0_i32, %c0_i32_0 : i32, i32
  }
  func.func @transform_2(%arg0: i32) -> (i32, i32) {
    %c0_i32 = arith.constant 0 : i32
    %c0_i32_0 = arith.constant 0 : i32
    %c0_i32_1 = arith.constant 0 : i32
    return %c0_i32, %c0_i32_0 : i32, i32
  }
  func.func @transform_3(%arg0: i32) -> (i32, i32) {
    %c0_i32 = arith.constant 0 : i32
    %c0_i32_0 = arith.constant 0 : i32
    %c0_i32_1 = arith.constant 0 : i32
    return %c0_i32, %c0_i32_0 : i32, i32
  }
  func.func @transform_4(%arg0: i32) -> (i32, i32) {
    %c0_i32 = arith.constant 0 : i32
    %c0_i32_0 = arith.constant 0 : i32
    %c0_i32_1 = arith.constant 0 : i32
    return %c0_i32, %c0_i32_0 : i32, i32
  }
  func.func @transform_5(%arg0: i32) -> (i32, i32) {
    %c0_i32 = arith.constant 0 : i32
    %c0_i32_0 = arith.constant 0 : i32
    %c0_i32_1 = arith.constant 0 : i32
    return %c0_i32, %c0_i32_0 : i32, i32
  }
  func.func @transform_6(%arg0: i32) -> (i32, i32) {
    %c0_i32 = arith.constant 0 : i32
    %c0_i32_0 = arith.constant 0 : i32
    %c0_i32_1 = arith.constant 0 : i32
    return %c0_i32, %c0_i32_0 : i32, i32
  }
  func.func @transform_7(%arg0: i32) -> (i32, i32) {
    %c0_i32 = arith.constant 0 : i32
    %c0_i32_0 = arith.constant 0 : i32
    return %arg0, %c0_i32 : i32, i32
  }
  func.func @transform_8(%arg0: i32) -> (i32, i32) {
    %c0_i32 = arith.constant 0 : i32
    %c0_i32_0 = arith.constant 0 : i32
    return %arg0, %c0_i32 : i32, i32
  }
}

</mosaic_0001>

<llo_original>
// kernel: tpu_custom_call.1
$region0: #{tpu_custom_call.1}
  #allocation0 [shape = 'u32[]', space=smem, size = 0x4, offset = 0x4, fixed_abs, tag = 'smem constant byte address 0x4 - core index']
  #allocation1 [shape = 'u32[72,128]{1,0:T(1,128)}', space=vmem, size = 0x9000, scoped, tag = 'internal scratch']
  %s0 = inlined_call_operand.hbm [shape: f32[8,32], index: 0, kind: input, shape index: {}]
  %s1 = inlined_call_operand.hbm [shape: bf16[32,64], index: 1, kind: input, shape index: {}]
  %s2 = inlined_call_operand.vmem [shape: f32[1,64], index: 2, kind: input, shape index: {}]
  %s3 = inlined_call_operand.hbm [shape: bf16[64,64], index: 3, kind: input, shape index: {}]
  %s4 = inlined_call_operand.vmem [shape: f32[1,64], index: 4, kind: input, shape index: {}]
  %s5 = inlined_call_operand.hbm [shape: bf16[64,128], index: 5, kind: input, shape index: {}]
  %s6 = inlined_call_operand.vmem [shape: f32[1,128], index: 6, kind: input, shape index: {}]
  %s7 = inlined_call_operand.hbm [shape: bf16[8,128], index: 7, kind: output, shape index: {0}]
  %s8 = inlined_call_operand.vmem [shape: f32[8,1], index: 8, kind: output, shape index: {1}]
  %9 = xla_tuple %s7, %s8
  %s10 = sld [smem:[#allocation0]]
  $region62: #{tpu_custom_call.1} parent=0
    _
  %s12 = ssub.s32 1, %s10
  %s13 = scalar_select 0, %s12, %s10
  $region1: #{tpu_custom_call.1} parent=0
    #allocation2 [shape = 'u8[4096]{0}', space=vmem, size = 0x1000, scoped, tag = 'input window, operand 0, single buffered']
    #allocation3 [shape = 's32[1]{0}', space=sflag, size = 0x4, scoped, tag = 'scoped memory for tpu_custom_call.1']
    #allocation4 [shape = 's32[1]{0}', space=sflag, size = 0x4, scoped, tag = 'scoped memory for tpu_custom_call.1']
    #allocation5 [shape = 'u8[8192]{0}', space=vmem, size = 0x2000, scoped, tag = 'input window, operand 1, single buffered']
    #allocation6 [shape = 's32[1]{0}', space=sflag, size = 0x4, scoped, tag = 'scoped memory for tpu_custom_call.1']
    #allocation7 [shape = 'u8[16384]{0}', space=vmem, size = 0x4000, scoped, tag = 'input window, operand 3, single buffered']
    #allocation8 [shape = 'u8[16384]{0}', space=vmem, size = 0x4000, scoped, tag = 'input window, operand 5, single buffered']
    #allocation9 [shape = 's32[1]{0}', space=sflag, size = 0x4, scoped, tag = 'scoped memory for tpu_custom_call.1']
    #allocation10 [shape = 'u8[2048]{0}', space=vmem, size = 0x800, scoped, tag = 'output window, operand 0, single buffered']
    %14 = vsyncpa [#allocation3], 0
    %15 = vsyncpa [#allocation6], 0
    %16 = vsyncpa [#allocation9], 0
    %17 = vsyncpa [#allocation4], 0
    // Predicated region
    $region2: #{tpu_custom_call.1} parent=1 // pred_check
      _
    $region3: #{tpu_custom_call.1} parent=1 // pred_check_branch
      %19 = sbr.rel (0) target = $region5
    $region4: #{tpu_custom_call.1} parent=1 // pred_region
      %21 = vsyncadd [#allocation3], 0
      %s23 = sshll.u32 %s0, 4
      %s24 = int_to_ptr.hbm [resolvable:$true] %s23
      %s25 = sshll.u32 [#allocation2], 4
      %s26 = int_to_ptr.vmem [resolvable:$true] %s25
      %28 = dma.hbm_to_vmem [thread:$0]  %s24, 128, %s26, [#allocation3]
    $region5: #{tpu_custom_call.1} parent=1 // pred_fallthru
      _
    // Predicated region
    $region6: #{tpu_custom_call.1} parent=1 // pred_check
      _
    $region7: #{tpu_custom_call.1} parent=1 // pred_check_branch
      %30 = sbr.rel (0) target = $region9
    $region8: #{tpu_custom_call.1} parent=1 // pred_region
      %32 = vsyncadd [#allocation6], 0
      %s33 = sshll.u32 %s1, 4
      %s34 = int_to_ptr.hbm [resolvable:$true] %s33
      %s35 = sshll.u32 [#allocation5], 4
      %s36 = int_to_ptr.vmem [resolvable:$true] %s35
      %41 = dma.hbm_to_vmem [thread:$0]  %s34, 256, %s36, [#allocation6], 64, 64, 4
    $region9: #{tpu_custom_call.1} parent=1 // pred_fallthru
      _
    // Predicated region
    $region10: #{tpu_custom_call.1} parent=1 // pred_check
      _
    $region11: #{tpu_custom_call.1} parent=1 // pred_check_branch
      %43 = sbr.rel (0) target = $region13
    $region12: #{tpu_custom_call.1} parent=1 // pred_region
      _
    $region13: #{tpu_custom_call.1} parent=1 // pred_fallthru
      _
    // Predicated region
    $region14: #{tpu_custom_call.1} parent=1 // pred_check
      _
    $region15: #{tpu_custom_call.1} parent=1 // pred_check_branch
      %45 = sbr.rel (0) target = $region17
    $region16: #{tpu_custom_call.1} parent=1 // pred_region
      %47 = vsyncadd [#allocation6], 0
      %s48 = sshll.u32 %s3, 4
      %s49 = int_to_ptr.hbm [resolvable:$true] %s48
      %s50 = sshll.u32 [#allocation7], 4
      %s51 = int_to_ptr.vmem [resolvable:$true] %s50
      %56 = dma.hbm_to_vmem [thread:$0]  %s49, 512, %s51, [#allocation6], 64, 64, 4
    $region17: #{tpu_custom_call.1} parent=1 // pred_fallthru
      _
    // Predicated region
    $region18: #{tpu_custom_call.1} parent=1 // pred_check
      _
    $region19: #{tpu_custom_call.1} parent=1 // pred_check_branch
      %58 = sbr.rel (0) target = $region21
    $region20: #{tpu_custom_call.1} parent=1 // pred_region
      _
    $region21: #{tpu_custom_call.1} parent=1 // pred_fallthru
      _
    // Predicated region
    $region22: #{tpu_custom_call.1} parent=1 // pred_check
      _
    $region23: #{tpu_custom_call.1} parent=1 // pred_check_branch
      %60 = sbr.rel (0) target = $region25
    $region24: #{tpu_custom_call.1} parent=1 // pred_region
      %62 = vsyncadd [#allocation9], 0
      %s63 = sshll.u32 %s5, 4
      %s64 = int_to_ptr.hbm [resolvable:$true] %s63
      %s65 = sshll.u32 [#allocation8], 4
      %s66 = int_to_ptr.vmem [resolvable:$true] %s65
      %71 = dma.hbm_to_vmem [thread:$0]  %s64, 512, %s66, [#allocation9], 64, 64, 4
    $region25: #{tpu_custom_call.1} parent=1 // pred_fallthru
      _
    // Predicated region
    $region26: #{tpu_custom_call.1} parent=1 // pred_check
      _
    $region27: #{tpu_custom_call.1} parent=1 // pred_check_branch
      %73 = sbr.rel (0) target = $region29
    $region28: #{tpu_custom_call.1} parent=1 // pred_region
      _
    $region29: #{tpu_custom_call.1} parent=1 // pred_fallthru
      _
    // Predicated region
    $region30: #{tpu_custom_call.1} parent=1 // pred_check
      _
    $region31: #{tpu_custom_call.1} parent=1 // pred_check_branch
      %75 = sbr.rel (0) target = $region33
    $region32: #{tpu_custom_call.1} parent=1 // pred_region
      %77 = dma.done [#allocation3], 128
    $region33: #{tpu_custom_call.1} parent=1 // pred_fallthru
      _
    // Predicated region
    $region34: #{tpu_custom_call.1} parent=1 // pred_check
      _
    $region35: #{tpu_custom_call.1} parent=1 // pred_check_branch
      %79 = sbr.rel (0) target = $region37
    $region36: #{tpu_custom_call.1} parent=1 // pred_region
      %81 = dma.done [#allocation6], 256
    $region37: #{tpu_custom_call.1} parent=1 // pred_fallthru
      _
    // Predicated region
    $region38: #{tpu_custom_call.1} parent=1 // pred_check
      _
    $region39: #{tpu_custom_call.1} parent=1 // pred_check_branch
      %83 = sbr.rel (0) target = $region41
    $region40: #{tpu_custom_call.1} parent=1 // pred_region
      %85 = dma.done [#allocation6], 512
    $region41: #{tpu_custom_call.1} parent=1 // pred_fallthru
      _
    // Predicated region
    $region42: #{tpu_custom_call.1} parent=1 // pred_check
      _
    $region43: #{tpu_custom_call.1} parent=1 // pred_check_branch
      %87 = sbr.rel (0) target = $region45
    $region44: #{tpu_custom_call.1} parent=1 // pred_region
      %89 = dma.done [#allocation9], 512
    $region45: #{tpu_custom_call.1} parent=1 // pred_fallthru
      _
    %v91 = vld [vmem:[#allocation2] sm:$0xff]
    %v92 = vpack.c.bf16 %v91, %v91
    %v93 = vld [vmem:[#allocation5] sm:$0xf]
    %v94 = vld [vmem:[#allocation5 + $0x4] sm:$0xf]
    %v95 = vld [vmem:[#allocation5 + $0x8] sm:$0xf]
    %v96 = vld [vmem:[#allocation5 + $0xc] sm:$0xf]
    %v97 = vld [vmem:[%s2] sm:$0x1]
    %v99 = vperm.slane %v97, 0
    %v105 = vunpack.c.l.b16 %v93
    %v106 = vunpack.c.l.b16 %v94
    %v107 = vunpack.c.l.b16 %v95
    %v108 = vunpack.c.l.b16 %v96
    %v109 = vpack.c.b16 %v106, %v105
    %v110 = vpack.c.b16 %v108, %v107
    %vm113 = vcmask 261120
    %v115 = vsel %vm113, %v92, 0
    %117 = vmatpush.bf16.msra.mxu0 0
    %118 = vmatpush.bf16.msra.mxu0 0
    %119 = vmatpush.bf16.msra.mxu0 0
    %120 = vmatpush.bf16.msra.mxu0 0
    %121 = vmatpush.bf16.msra.mxu0 0
    %122 = vmatpush.bf16.msra.mxu0 0
    %123 = vmatpush.bf16.msra.mxu0 %v110
    %124 = vmatpush.bf16.msra.mxu0 %v109
    %125 = vmatmul.bf16.gmra.mxu0 %v115
    %v126 = vpop.f32.mrf.mxu0
    %v127 = vadd.f32 %v99, %v126
    %v128 = vpop.f32.mrf.mxu0
    %129 = vdwg.mxu0
    %v130 = vmax.f32 %v127, 0.0
    %v131 = vpack.c.bf16 %v130, %v130
    %v132 = vld [vmem:[#allocation7] sm:$0xf]
    %v133 = vld [vmem:[#allocation7 + $0x4] sm:$0xf]
    %v134 = vld [vmem:[#allocation7 + $0x8] sm:$0xf]
    %v135 = vld [vmem:[#allocation7 + $0xc] sm:$0xf]
    %v136 = vld [vmem:[#allocation7 + $0x10] sm:$0xf]
    %v137 = vld [vmem:[#allocation7 + $0x14] sm:$0xf]
    %v138 = vld [vmem:[#allocation7 + $0x18] sm:$0xf]
    %v139 = vld [vmem:[#allocation7 + $0x1c] sm:$0xf]
    %v140 = vld [vmem:[%s4] sm:$0x1]
    %v142 = vperm.slane %v140, 0
    %v152 = vunpack.c.l.b16 %v132
    %v153 = vunpack.c.l.b16 %v133
    %v154 = vunpack.c.l.b16 %v134
    %v155 = vunpack.c.l.b16 %v135
    %v156 = vunpack.c.l.b16 %v136
    %v157 = vunpack.c.l.b16 %v137
    %v158 = vunpack.c.l.b16 %v138
    %v159 = vunpack.c.l.b16 %v139
    %v160 = vpack.c.b16 %v153, %v152
    %v161 = vpack.c.b16 %v155, %v154
    %v162 = vpack.c.b16 %v157, %v156
    %v163 = vpack.c.b16 %v159, %v158
    %vm168 = vcmask 523264
    %v170 = vsel %vm168, %v131, 0
    %172 = vmatpush.bf16.msra.mxu0 0
    %173 = vmatpush.bf16.msra.mxu0 0
    %174 = vmatpush.bf16.msra.mxu0 0
    %175 = vmatpush.bf16.msra.mxu0 0
    %176 = vmatpush.bf16.msra.mxu0 %v163
    %177 = vmatpush.bf16.msra.mxu0 %v162
    %178 = vmatpush.bf16.msra.mxu0 %v161
    %179 = vmatpush.bf16.msra.mxu0 %v160
    %180 = vmatmul.bf16.gmra.mxu0 %v170
    %v181 = vpop.f32.mrf.mxu0
    %v182 = vadd.f32 %v142, %v181
    %v183 = vpop.f32.mrf.mxu0
    %184 = vdwg.mxu0
    %v185 = vmax.f32 %v182, 0.0
    %v186 = vpack.c.bf16 %v185, %v185
    %v187 = vld [vmem:[#allocation8] sm:$0xf]
    %v188 = vld [vmem:[#allocation8 + $0x4] sm:$0xf]
    %v189 = vld [vmem:[#allocation8 + $0x8] sm:$0xf]
    %v190 = vld [vmem:[#allocation8 + $0xc] sm:$0xf]
    %v191 = vld [vmem:[#allocation8 + $0x10] sm:$0xf]
    %v192 = vld [vmem:[#allocation8 + $0x14] sm:$0xf]
    %v193 = vld [vmem:[#allocation8 + $0x18] sm:$0xf]
    %v194 = vld [vmem:[#allocation8 + $0x1c] sm:$0xf]
    %v195 = vld [vmem:[%s6] sm:$0x1]
    %v197 = vperm.slane %v195, 0
    %v207 = vunpack.c.l.b16 %v187
    %v208 = vunpack.c.l.b16 %v188
    %v209 = vunpack.c.l.b16 %v189
    %v210 = vunpack.c.l.b16 %v190
    %v211 = vunpack.c.l.b16 %v191
    %v212 = vunpack.c.l.b16 %v192
    %v213 = vunpack.c.l.b16 %v193
    %v214 = vunpack.c.l.b16 %v194
    %v215 = vpack.c.b16 %v208, %v207
    %v216 = vpack.c.b16 %v210, %v209
    %v217 = vpack.c.b16 %v212, %v211
    %v218 = vpack.c.b16 %v214, %v213
    %v224 = vsel %vm168, %v186, 0
    %226 = vmatpush.bf16.msra.mxu0 0
    %227 = vmatpush.bf16.msra.mxu0 0
    %228 = vmatpush.bf16.msra.mxu0 0
    %229 = vmatpush.bf16.msra.mxu0 0
    %230 = vmatpush.bf16.msra.mxu0 %v218
    %231 = vmatpush.bf16.msra.mxu0 %v217
    %232 = vmatpush.bf16.msra.mxu0 %v216
    %233 = vmatpush.bf16.msra.mxu0 %v215
    %234 = vmatmul.bf16.gmra.mxu0 %v224
    %v235 = vpop.f32.mrf.mxu0
    %v236 = vadd.f32 %v197, %v235
    %v237 = vpop.f32.mrf.mxu0
    %238 = vdwg.mxu0
    %v239 = vlaneseq
    %v240 = vand.u32 %v239, 127
    %vm241 = vcmp.lt.s32.totalorder %v240, 4
    %vm242 = vcmp.ge.s32.totalorder %v240, 4
    %vm243 = vcmp.lt.s32.totalorder %v240, 8
    %vm244 = vmand %vm242, %vm243
    %v245 = vsel %vm241, 1, 0
    %vm246 = vcmp.eq.s32.totalorder %v245, 1
    %v247 = vsel %vm246, %v236, -1e+30
    %248 = vmax.xlane.f32.xlu0 %v247
    %v249 = vpop.xlane.xlu0 %248
    %v250 = vsub.f32 %v247, %v249
    %v251 = vmul.f32 %v250, 1.442695
    %v252 = vpow.pop %v251
    %253 = vadd.xlane.f32.xlu0 %v252
    %v254 = vpop.xlane.xlu0 %253
    %v255 = vlog2.pop %v254
    %v256 = vmul.f32 %v255, 0.6931472
    %v257 = vadd.f32 %v249, %v256
    %v258 = vsub.f32 %v236, %v257
    %v259 = vsel %vm244, 1, 0
    %vm260 = vcmp.eq.s32.totalorder %v259, 1
    %v261 = vsel %vm260, %v258, %v236
    %v262 = vpack.c.bf16 %v261, %v261
    %263 = vst [vmem:[#allocation10] sm:$0xf] %v262
    %vm264 = vcmp.eq.s32.totalorder %v240, 8
    %v265 = vsel %vm264, 1, 0
    %vm266 = vcmp.eq.s32.totalorder %v265, 1
    %v267 = vsel %vm266, %v236, 0.0
    %268 = vadd.xlane.f32.xlu0 %v267
    %v269 = vpop.xlane.xlu0 %268
    %vm270 = vcmask 7168
    %271 = vst.msk [vmem:[%s8] sm:$0xff] %vm270, %v269
    // Predicated region
    $region46: #{tpu_custom_call.1} parent=1 // pred_check
      _
    $region47: #{tpu_custom_call.1} parent=1 // pred_check_branch
      %273 = sbr.rel (0) target = $region49
    $region48: #{tpu_custom_call.1} parent=1 // pred_region
      %275 = vsyncadd [#allocation4], 0
      %s277 = sshll.u32 [#allocation10], 4
      %s278 = int_to_ptr.vmem [resolvable:$true] %s277
      %s279 = sshll.u32 %s7, 4
      %s280 = int_to_ptr.hbm [resolvable:$true] %s279
      %282 = dma.vmem_to_hbm [thread:$0]  %s278, 64, %s280, [#allocation4]
    $region49: #{tpu_custom_call.1} parent=1 // pred_fallthru
      _
    // Predicated region
    $region50: #{tpu_custom_call.1} parent=1 // pred_check
      _
    $region51: #{tpu_custom_call.1} parent=1 // pred_check_branch
      %284 = sbr.rel (0) target = $region53
    $region52: #{tpu_custom_call.1} parent=1 // pred_region
      _
    $region53: #{tpu_custom_call.1} parent=1 // pred_fallthru
      _
    // Predicated region
    $region54: #{tpu_custom_call.1} parent=1 // pred_check
      _
    $region55: #{tpu_custom_call.1} parent=1 // pred_check_branch
      %286 = sbr.rel (0) target = $region57
    $region56: #{tpu_custom_call.1} parent=1 // pred_region
      %288 = dma.done [#allocation4], 64
    $region57: #{tpu_custom_call.1} parent=1 // pred_fallthru
      _
    // Predicated region
    $region58: #{tpu_custom_call.1} parent=1 // pred_check
      _
    $region59: #{tpu_custom_call.1} parent=1 // pred_check_branch
      %290 = sbr.rel (0) target = $region61
    $region60: #{tpu_custom_call.1} parent=1 // pred_region
      _
    $region61: #{tpu_custom_call.1} parent=1 // pred_fallthru
      _
    %291 = vsyncpa [#allocation3], 1
    %292 = vsyncpa [#allocation6], 1
    %293 = vsyncpa [#allocation9], 1
    %294 = vsyncpa [#allocation4], 1

</llo_original>
